<compile_context>
chip_gen: v5e
topology: v5e:2x2
jax: 0.10.0
libtpu: 0.0.40
codegen_flags: <defaults>
</compile_context>

<pallas_src>
import math

import jax
import jax.numpy as jnp
from jax.experimental import pallas as pl
from jax.experimental.pallas import tpu as pltpu


# ---------------------------------------------------------------------------
# Kernel
# ---------------------------------------------------------------------------
def _sinusoidal_kernel(time_ref, freq_ref, phase_ref, out_ref):
    # time_ref : (TB, 1)  f32
    # freq_ref : (1, dim) f32   -- [freqs, freqs]
    # phase_ref: (1, dim) f32   -- [0...0, pi/2...pi/2]
    # out_ref  : (TB, dim) f32
    # One broadcasted multiply + add (VPU), one sin (EUP), one full-width
    # unmasked store (lane-dense; the single biggest measured store lever).
    out_ref[...] = jnp.sin(time_ref[...] * freq_ref[...] + phase_ref[...])


# ---------------------------------------------------------------------------
# Wrapper helpers
# ---------------------------------------------------------------------------
_OUT_BUF_BYTES = 8 * 1024 * 1024  # per output buffer; double-buffered => 16 MiB


def _freq_phase_tables(dim: int):
    half = dim // 2
    scale = math.log(10000.0) / (half - 1)
    freqs = jnp.exp(jnp.arange(half, dtype=jnp.float32) * -scale)        # (H,)
    freqs_full = jnp.concatenate([freqs, freqs]).reshape(1, dim)         # (1, dim)
    phase = jnp.concatenate(
        [jnp.zeros((half,), jnp.float32),
         jnp.full((half,), jnp.pi / 2, dtype=jnp.float32)]
    ).reshape(1, dim)                                                    # (1, dim)
    return freqs_full, phase


def _row_cap(b: int, dim: int) -> int:
    """Max batch-tile rows: VMEM budget AND keep >= ~4 parallel grid steps."""
    vmem_rows = max(8, (_OUT_BUF_BYTES // (4 * dim)) // 8 * 8)
    multi_step_rows = max(8, pl.cdiv(pl.cdiv(b, 4), 8) * 8)   # v7x: feed both TCs
    return min(vmem_rows, multi_step_rows)


def _largest_div_tile(b: int, cap_rows: int) -> int:
    """Largest multiple-of-8 divisor of b that is <= cap_rows (b % 8 == 0)."""
    n = b // 8
    cap_u = max(1, cap_rows // 8)
    best = 1
    i = 1
    while i * i <= n:
        if n % i == 0:
            for d in (i, n // i):
                if d <= cap_u and d > best:
                    best = d
        i += 1
    return best * 8


def _reference(time: jax.Array, dim: int) -> jax.Array:
    half = dim // 2
    scale = math.log(10000.0) / (half - 1)
    freqs = jnp.exp(jnp.arange(half, dtype=jnp.float32) * -scale)
    emb = time.astype(jnp.float32)[:, None] * freqs[None, :]
    return jnp.concatenate([jnp.sin(emb), jnp.cos(emb)], axis=-1)


# ---------------------------------------------------------------------------
# Public entry point
# ---------------------------------------------------------------------------
def sinusoidal_position_embeddings(time: jax.Array, dim: int, *,
                                   min_pallas_elements: int = 1 << 18) -> jax.Array:
    """time: (B,) float array.  Returns (B, dim) float32 embeddings."""
    assert dim % 2 == 0, "dim must be even"
    assert dim >= 4, "dim == 2 divides by zero (half_dim - 1 == 0), as in PyTorch"
    b = time.shape[0]
    time_f32 = time.astype(jnp.float32)

    # Small-size fallback: launch + single-step grid overhead dominates; let
    # XLA fuse the expression into the consumer instead.
    if b * dim < min_pallas_elements:
        return _reference(time_f32, dim)

    freqs_full, phase = _freq_phase_tables(dim)
    cap = _row_cap(b, dim)

    # Prefer a tile that exactly divides B (no pad, no slicing pass afterwards).
    tb = _largest_div_tile(b, cap) if b % 8 == 0 else 0
    if tb >= min(cap, 256):
        b_pad = b
    else:
        # Ragged or awkward B: pad (cheap, input is (B,1)) and slice once.
        tb = cap
        b_pad = pl.cdiv(b, tb) * tb

    time_2d = time_f32.reshape(b, 1)
    if b_pad != b:
        time_2d = jnp.pad(time_2d, ((0, b_pad - b), (0, 0)))

    out = pl.pallas_call(
        _sinusoidal_kernel,
        out_shape=jax.ShapeDtypeStruct((b_pad, dim), jnp.float32),
        grid=(b_pad // tb,),
        in_specs=[
            pl.BlockSpec((tb, 1), lambda i: (i, 0)),        # time tile
            pl.BlockSpec((1, dim), lambda i: (0, 0)),        # duplicated freqs
            pl.BlockSpec((1, dim), lambda i: (0, 0)),        # phase table
        ],
        out_specs=pl.BlockSpec((tb, dim), lambda i: (i, 0)),
        compiler_params=pltpu.CompilerParams(
            dimension_semantics=("parallel",),
            vmem_limit_bytes=32 * 1024 * 1024,
        ),
    )(time_2d, freqs_full, phase)

    return out if b_pad == b else out[:b]


# ---------------------------------------------------------------------------
# Test
# ---------------------------------------------------------------------------
if __name__ == "__main__":
    key = jax.random.PRNGKey(0)
    # Small configs: original toy size and a lane-dense one (dim % 256 == 0).
    configs = [(8, 32), (64, 256)]
    for b, dim in configs:
        key, sub = jax.random.split(key)
        time = jax.random.uniform(sub, (b,), dtype=jnp.float32,
                                  minval=0.0, maxval=1000.0)

        # Force the Pallas path so the kernel is exercised at these small sizes.
        out = jax.block_until_ready(
            sinusoidal_position_embeddings(time, dim, min_pallas_elements=0))
        ref = _reference(time, dim)
        assert out.shape == (b, dim)
        # atol=1e-4 covers the <= ~3e-5 deviation of cos-via-sin(x + pi/2)
        # for arguments up to ~1e3 (half an f32 ulp of the shifted argument).
        assert jnp.allclose(out, ref, atol=1e-4, rtol=1e-5), \
            f"pallas path mismatch vs reference for (B={b}, dim={dim})"

        # Default path (small-size XLA fallback) must also match.
        out_fb = jax.block_until_ready(sinusoidal_position_embeddings(time, dim))
        assert jnp.allclose(out_fb, ref, atol=1e-5, rtol=1e-5), \
            f"fallback path mismatch vs reference for (B={b}, dim={dim})"

    print("KERNEL_OK")
</pallas_src>

<mosaic_0001>
module attributes {stable_mosaic.version = 11 : i64} {
  func.func @_sinusoidal_kernel(%arg0: i32, %arg1: memref<8x1xf32, #tpu.memory_space<vmem>>, %arg2: memref<1x32xf32, #tpu.memory_space<vmem>>, %arg3: memref<1x32xf32, #tpu.memory_space<vmem>>, %arg4: memref<8x32xf32, #tpu.memory_space<vmem>>) attributes {dimension_semantics = [#tpu.dimension_semantics<parallel>], iteration_bounds = array<i64: 1>, scalar_prefetch = 0 : i64, scratch_operands = 0 : i64, tpu.core_type = #tpu.core_type<tc>, window_params = [{transform_indices = @transform_0, window_bounds = array<i64: 8, 1>}, {pipeline_mode = #tpu.pipeline_mode<synchronous>, transform_indices = @transform_1, window_bounds = array<i64: 1, 32>}, {pipeline_mode = #tpu.pipeline_mode<synchronous>, transform_indices = @transform_2, window_bounds = array<i64: 1, 32>}, {transform_indices = @transform_3, window_bounds = array<i64: 8, 32>}]} {
    %c0 = arith.constant 0 : index
    %c0_0 = arith.constant 0 : index
    %0 = vector.load %arg1[%c0, %c0_0] : memref<8x1xf32, #tpu.memory_space<vmem>>, vector<8x1xf32>
    %c0_1 = arith.constant 0 : index
    %c0_2 = arith.constant 0 : index
    %1 = vector.load %arg2[%c0_1, %c0_2] : memref<1x32xf32, #tpu.memory_space<vmem>>, vector<1x32xf32>
    %2 = vector.broadcast %0 : vector<8x1xf32> to vector<8x32xf32>
    %3 = vector.broadcast %1 : vector<1x32xf32> to vector<8x32xf32>
    %4 = arith.mulf %2, %3 : vector<8x32xf32>
    %c0_3 = arith.constant 0 : index
    %c0_4 = arith.constant 0 : index
    %5 = vector.load %arg3[%c0_3, %c0_4] : memref<1x32xf32, #tpu.memory_space<vmem>>, vector<1x32xf32>
    %6 = vector.broadcast %5 : vector<1x32xf32> to vector<8x32xf32>
    %7 = arith.addf %4, %6 : vector<8x32xf32>
    %8 = math.sin %7 : vector<8x32xf32>
    %c0_5 = arith.constant 0 : index
    %c0_6 = arith.constant 0 : index
    %9 = vector.load %arg4[%c0_5, %c0_6] : memref<8x32xf32, #tpu.memory_space<vmem>>, vector<8x32xf32>
    tpu.vector_store %arg4[%c0_5, %c0_6], %8 {strides = array<i32>} : memref<8x32xf32, #tpu.memory_space<vmem>>, vector<8x32xf32>,
    return
  }
  func.func @transform_0(%arg0: i32) -> (i32, i32) {
    %c0_i32 = arith.constant 0 : i32
    %c0_i32_0 = arith.constant 0 : i32
    return %arg0, %c0_i32 : i32, i32
  }
  func.func @transform_1(%arg0: i32) -> (i32, i32) {
    %c0_i32 = arith.constant 0 : i32
    %c0_i32_0 = arith.constant 0 : i32
    %c0_i32_1 = arith.constant 0 : i32
    return %c0_i32, %c0_i32_0 : i32, i32
  }
  func.func @transform_2(%arg0: i32) -> (i32, i32) {
    %c0_i32 = arith.constant 0 : i32
    %c0_i32_0 = arith.constant 0 : i32
    %c0_i32_1 = arith.constant 0 : i32
    return %c0_i32, %c0_i32_0 : i32, i32
  }
  func.func @transform_3(%arg0: i32) -> (i32, i32) {
    %c0_i32 = arith.constant 0 : i32
    %c0_i32_0 = arith.constant 0 : i32
    return %arg0, %c0_i32 : i32, i32
  }
}

</mosaic_0001>

<llo_original>
// kernel: tpu_custom_call.1
$region0: #{tpu_custom_call.1}
  #allocation0 [shape = 'u32[]', space=smem, size = 0x4, offset = 0x4, fixed_abs, tag = 'smem constant byte address 0x4 - core index']
  #allocation1 [shape = 'u32[72,128]{1,0:T(1,128)}', space=vmem, size = 0x9000, scoped, tag = 'internal scratch']
  %s0 = inlined_call_operand.vmem [shape: f32[8,1], index: 0, kind: input, shape index: {}]
  %s1 = inlined_call_operand.vmem [shape: f32[1,32], index: 1, kind: input, shape index: {}]
  %s2 = inlined_call_operand.vmem [shape: f32[1,32], index: 2, kind: input, shape index: {}]
  %s3 = inlined_call_operand.hbm [shape: f32[8,32], index: 3, kind: output, shape index: {}]
  %s4 = sld [smem:[#allocation0]]
  $region22: #{tpu_custom_call.1} parent=0
    _
  %s6 = ssub.s32 1, %s4
  %s7 = scalar_select 0, %s6, %s4
  $region1: #{tpu_custom_call.1} parent=0
    #allocation2 [shape = 'u8[4096]{0}', space=vmem, size = 0x1000, scoped, tag = 'output window, operand 0, single buffered']
    #allocation3 [shape = 's32[1]{0}', space=sflag, size = 0x4, scoped, tag = 'scoped memory for tpu_custom_call.1']
    %8 = vsyncpa [#allocation3], 0
    // Predicated region
    $region2: #{tpu_custom_call.1} parent=1 // pred_check
      _
    $region3: #{tpu_custom_call.1} parent=1 // pred_check_branch
      %10 = sbr.rel (0) target = $region5
    $region4: #{tpu_custom_call.1} parent=1 // pred_region
      _
    $region5: #{tpu_custom_call.1} parent=1 // pred_fallthru
      _
    // Predicated region
    $region6: #{tpu_custom_call.1} parent=1 // pred_check
      _
    $region7: #{tpu_custom_call.1} parent=1 // pred_check_branch
      %12 = sbr.rel (0) target = $region9
    $region8: #{tpu_custom_call.1} parent=1 // pred_region
      _
    $region9: #{tpu_custom_call.1} parent=1 // pred_fallthru
      _
    // Predicated region
    $region10: #{tpu_custom_call.1} parent=1 // pred_check
      _
    $region11: #{tpu_custom_call.1} parent=1 // pred_check_branch
      %14 = sbr.rel (0) target = $region13
    $region12: #{tpu_custom_call.1} parent=1 // pred_region
      _
    $region13: #{tpu_custom_call.1} parent=1 // pred_fallthru
      _
    %v15 = vld [vmem:[%s0] sm:$0xff]
    %v16 = vld [vmem:[%s1] sm:$0x1]
    %18 = vset.pattern.permute.xlu0 0
    %19 = vperm.xlu0 %18, %v15
    %v20 = vpop.permute.xlu0 %19
    %v23 = vperm.slane %v16, 0
    %v25 = vmul.f32 %v20, %v23
    %v26 = vld [vmem:[%s2] sm:$0x1]
    %v28 = vperm.slane %v26, 0
    %v30 = vadd.f32 %v25, %v28
    %v31 = vand.u32 2147483647, %v30
    %vm32 = vcmp.le.f32.partialorder %v31, 0.7853982
    %vm33 = vcmp.lt.s32.totalorder %v30, 0
    %v34 = vand.u32 %v30, 2139095040
    %v35 = vshrl.u32 %v34, 23
    %v36 = vsub.s32 %v35, 127
    %v37 = vand.u32 2147483647, %v30
    %v38 = vand.u32 %v37, 8388607
    %v39 = vor.u32 %v38, 8388608
    %v40 = vsub.s32 0, %v39
    %v41 = vadd.s32 %v36, 1
    %vm42 = vcmp.gt.s32.totalorder %v41, 0
    %v43 = vsel %vm42, %v41, 0
    %v44 = vshrl.u32 %v43, 5
    %v45 = vand.u32 %v43, 31
    %v46 = vsub.s32 32, %v45
    %v47 = vshrl.u32 683565275, %v46
    %v48 = vshll.u32 683565275, %v45
    %v49 = vshrl.u32 2475754826, %v46
    %v50 = vor.u32 %v48, %v49
    %v51 = vshll.u32 2475754826, %v45
    %v52 = vshrl.u32 2131351028, %v46
    %v53 = vor.u32 %v51, %v52
    %v54 = vshll.u32 2131351028, %v45
    %v55 = vshrl.u32 2102212464, %v46
    %v56 = vor.u32 %v54, %v55
    %v57 = vshll.u32 2102212464, %v45
    %v58 = vshrl.u32 920167782, %v46
    %v59 = vor.u32 %v57, %v58
    %v60 = vshll.u32 920167782, %v45
    %v61 = vshrl.u32 1326507024, %v46
    %v62 = vor.u32 %v60, %v61
    %vm63 = vcmp.lt.s32.totalorder %v44, 1
    %vm64 = vcmp.lt.s32.totalorder %v44, 2
    %vm65 = vcmp.lt.s32.totalorder %v44, 3
    %vm66 = vcmp.lt.s32.totalorder %v44, 4
    %v67 = vsel %vm63, %v47, %v50
    %v68 = vsel %vm66, %v56, 2102212464
    %v69 = vsel %vm65, %v53, %v68
    %v70 = vsel %vm64, %v67, %v69
    %v71 = vsel %vm63, %v50, %v53
    %v72 = vsel %vm66, %v59, 920167782
    %v73 = vsel %vm65, %v56, %v72
    %v74 = vsel %vm64, %v71, %v73
    %v75 = vsel %vm63, %v53, %v56
    %v76 = vsel %vm66, %v62, 1326507024
    %v77 = vsel %vm65, %v59, %v76
    %v78 = vsel %vm64, %v75, %v77
    %v79 = vshll.u32 %v39, 8
    %v80 = vand.u32 %v79, 65535
    %v81 = vshrl.u32 %v79, 16
    %v82 = vand.u32 %v78, 65535
    %v83 = vshrl.u32 %v78, 16
    %v84 = vmul.u32 %v80, %v82
    %v85 = vmul.u32 %v80, %v83
    %v86 = vmul.u32 %v81, %v82
    %v87 = vmul.u32 %v81, %v83
    %v88 = vshll.u32 %v85, 16
    %v89 = vshrl.u32 %v85, 16
    %v90 = vshll.u32 %v86, 16
    %v91 = vshrl.u32 %v86, 16
    %vm92 = vc.u32 %v84, %v88
    %v93 = vsel %vm92, 1, 0
    %v94 = vadd.s32 %v84, %v88
    %v95 = vadd.s32 %v87, %v93
    %vm96 = vc.u32 %v94, %v90
    %v97 = vsel %vm96, 1, 0
    %v98 = vadd.s32 %v94, %v90
    %v99 = vadd.s32 %v95, %v97
    %v100 = vadd.s32 %v99, %v89
    %v101 = vadd.s32 %v100, %v91
    %v102 = vand.u32 %v79, 65535
    %v103 = vshrl.u32 %v79, 16
    %v104 = vand.u32 %v74, 65535
    %v105 = vshrl.u32 %v74, 16
    %v106 = vmul.u32 %v102, %v104
    %v107 = vmul.u32 %v102, %v105
    %v108 = vmul.u32 %v103, %v104
    %v109 = vmul.u32 %v103, %v105
    %v110 = vshll.u32 %v107, 16
    %v111 = vshrl.u32 %v107, 16
    %v112 = vshll.u32 %v108, 16
    %v113 = vshrl.u32 %v108, 16
    %vm114 = vc.u32 %v106, %v110
    %v115 = vsel %vm114, 1, 0
    %v116 = vadd.s32 %v106, %v110
    %v117 = vadd.s32 %v109, %v115
    %vm118 = vc.u32 %v116, %v112
    %v119 = vsel %vm118, 1, 0
    %v120 = vadd.s32 %v116, %v112
    %v121 = vadd.s32 %v117, %v119
    %v122 = vadd.s32 %v121, %v111
    %v123 = vadd.s32 %v122, %v113
    %v124 = vmul.u32 %v79, %v70
    %v125 = vadd.s32 %v101, %v120
    %vm126 = vc.u32 %v101, %v120
    %v127 = vadd.s32 %v123, 1
    %v128 = vsel %vm126, %v127, %v123
    %v129 = vadd.s32 %v124, %v128
    %v130 = vadd.s32 %v129, 536870912
    %v131 = vshrl.u32 %v130, 30
    %v132 = vshll.u32 %v131, 30
    %v133 = vsub.s32 %v129, %v132
    %vm134 = vcmp.lt.s32.totalorder %v133, 0
    %v135 = vsub.s32 0, %v133
    %v136 = vsel %vm134, %v135, %v133
    %v137 = vclz %v136
    %v138 = vsub.s32 %v137, 2
    %vm139 = vcmp.gt.s32.totalorder 0, %v138
    %v140 = vsel %vm139, 0, %v138
    %v141 = vsub.s32 32, %v140
    %v142 = vshll.u32 %v133, %v140
    %v143 = vshrl.u32 %v125, %v141
    %v144 = vor.u32 %v142, %v143
    %v145 = vsub.s32 4294967266, %v140
    %v146 = vadd.s32 %v145, 127
    %v147 = vshll.u32 %v146, 23
    %v148 = vor.u32 4788187, %v147
    %v149 = vand.u32 2147483647, %v148
    %v151 = vcvt.s32.f32 %v144
    %v152 = vmul.f32 %v151, %v149
    %v153 = vxor.u32 %v152, 2147483648
    %v154 = vsel %vm33, %v153, %v152
    %v155 = vsub.s32 4, %v131
    %v156 = vsel %vm33, %v155, %v131
    %v157 = vsel %vm32, %v30, %v154
    %v158 = vsel %vm32, 0, %v156
    %v159 = vmul.f32 %v157, %v157
    %v160 = vmul.f32 %v159, -0.001358992
    %v161 = vadd.f32 %v160, 0.041655596
    %v162 = vmul.f32 %v159, %v161
    %v163 = vadd.f32 %v162, -0.4999988
    %v164 = vmul.f32 %v159, %v163
    %v165 = vadd.f32 1.0, %v164
    %v166 = vmul.f32 %v157, %v157
    %v167 = vmul.f32 %v166, -0.00019511016
    %v168 = vadd.f32 %v167, 0.008332121
    %v169 = vmul.f32 %v166, %v168
    %v170 = vadd.f32 %v169, -0.16666654
    %v171 = vmul.f32 %v166, %v170
    %v172 = vadd.f32 %v171, 1.0
    %v173 = vmul.f32 %v172, %v157
    %vm174 = vweird.f32 %v30
    %v175 = vadd.s32 %v158, 3
    %v176 = vand.u32 %v175, 3
    %vm177 = vcmp.lt.s32.totalorder %v176, 2
    %vm178 = vcmp.eq.s32.totalorder %v176, 0
    %v179 = vxor.u32 %v173, 2147483648
    %v180 = vsel %vm178, %v165, %v179
    %vm181 = vcmp.eq.s32.totalorder %v176, 2
    %v182 = vxor.u32 %v165, 2147483648
    %v183 = vsel %vm181, %v182, %v173
    %v184 = vsel %vm177, %v180, %v183
    %v185 = vsel %vm174, nan, %v184
    %vm186 = vcmask 261120
    %187 = vst.msk [vmem:[#allocation2] sm:$0xff] %vm186, %v185
    // Predicated region
    $region14: #{tpu_custom_call.1} parent=1 // pred_check
      _
    $region15: #{tpu_custom_call.1} parent=1 // pred_check_branch
      %189 = sbr.rel (0) target = $region17
    $region16: #{tpu_custom_call.1} parent=1 // pred_region
      %191 = vsyncadd [#allocation3], 0
      %s193 = sshll.u32 [#allocation2], 4
      %s194 = int_to_ptr.vmem [resolvable:$true] %s193
      %s195 = sshll.u32 %s3, 4
      %s196 = int_to_ptr.hbm [resolvable:$true] %s195
      %198 = dma.vmem_to_hbm [thread:$0]  %s194, 128, %s196, [#allocation3]
    $region17: #{tpu_custom_call.1} parent=1 // pred_fallthru
      _
    // Predicated region
    $region18: #{tpu_custom_call.1} parent=1 // pred_check
      _
    $region19: #{tpu_custom_call.1} parent=1 // pred_check_branch
      %200 = sbr.rel (0) target = $region21
    $region20: #{tpu_custom_call.1} parent=1 // pred_region
      %202 = dma.done [#allocation3], 128
    $region21: #{tpu_custom_call.1} parent=1 // pred_fallthru
      _
    %203 = vsyncpa [#allocation3], 1

</llo_original>
